<compile_context>
chip_gen: v6e
topology: v6e:2x2x1
jax: 0.10.0
libtpu: 0.0.40
codegen_flags: <defaults>
</compile_context>

<pallas_src>
import functools

import jax
import jax.numpy as jnp
from jax import lax
from jax.experimental import pallas as pl
from jax.experimental.pallas import tpu as pltpu


def _pixel_shuffle_kernel(x_ref, o_ref, *, ry, rx, H, W, c_blk, w_chunk):
    # x_ref: (1, c_blk, ry*rx, H, W)   VMEM tile (input channels for the block)
    # o_ref: (1, c_blk, H, ry*W*rx)    VMEM tile (lane-folded view of output)
    if jnp.dtype(x_ref.dtype) in (jnp.dtype(jnp.bfloat16), jnp.dtype(jnp.float32)):
        compute_dtype = x_ref.dtype
    else:
        compute_dtype = jnp.float32

    # Static chunking of W so the MXU contraction length stays small.
    chunks = []
    w0 = 0
    while w0 < W:
        cw = min(w_chunk, W - w0)
        chunks.append((w0, cw))
        w0 += cw

    # Column-interleave permutation matrices, built ONCE per distinct chunk
    # width (hoisted out of the unrolled i/j loops; JAX does not CSE iotas).
    #   C_j[w, s] = 1  iff  s == w*rx + j        (shape (cw, cw*rx))
    cmats = {}
    for cw in sorted({cw for _, cw in chunks}):
        row = lax.broadcasted_iota(jnp.int32, (cw, cw * rx), 0)
        col = lax.broadcasted_iota(jnp.int32, (cw, cw * rx), 1)
        cmats[cw] = [
            (col == row * rx + j).astype(compute_dtype) for j in range(rx)
        ]

    for i in range(ry):
        for (w0, cw) in chunks:
            acc = None
            for j in range(rx):
                # All channels of the block at once for this sub-pixel (i, j).
                plane = x_ref[0, :, i * rx + j, :, w0:w0 + cw]   # (c_blk, H, cw)
                lhs = plane.reshape(c_blk * H, cw).astype(compute_dtype)
                part = jnp.dot(lhs, cmats[cw][j],
                               preferred_element_type=jnp.float32)
                acc = part if acc is None else acc + part        # (c_blk*H, cw*rx)
            # In the (H, ry*W*rx) output view, sub-row i of width-chunk w0 is a
            # contiguous lane slice -> plain (unstrided) store.
            col0 = i * W * rx + w0 * rx
            o_ref[0, :, :, col0:col0 + cw * rx] = (
                acc.astype(o_ref.dtype).reshape(c_blk, H, cw * rx))


def _largest_divisor_leq(n, cap):
    cap = int(max(1, min(n, cap)))
    for d in range(cap, 0, -1):
        if n % d == 0:
            return d
    return 1


def pixel_unshuffle(x, ry=2, rx=2, *, c_blk=None, w_chunk=128,
                    in_tile_bytes=1 << 20):
    """Pallas implementation of the PyTorch PixelUnshuffle.forward."""
    B, C, H, W = x.shape
    assert C % (ry * rx) == 0, "C must be divisible by ry*rx"
    c_out = C // (ry * rx)

    itemsize = jnp.dtype(x.dtype).itemsize
    per_channel_bytes = ry * rx * H * W * itemsize   # input bytes per out-chan
    if c_blk is None:
        cap = max(1, in_tile_bytes // per_channel_bytes)
        c_blk = _largest_divisor_leq(c_out, cap)
        # Keep >= 2 parallel grid steps when possible so both v7x TensorCores
        # get work even for B == 1.
        if B * (c_out // c_blk) < 2 and c_out > 1:
            c_blk = _largest_divisor_leq(c_out, c_out // 2)
    assert c_out % c_blk == 0

    # Free (contiguous) reshapes — no data movement.
    x_view = x.reshape(B, c_out, ry * rx, H, W)
    out_view_shape = (B, c_out, H, ry * W * rx)

    kernel = functools.partial(
        _pixel_shuffle_kernel, ry=ry, rx=rx, H=H, W=W, c_blk=c_blk,
        w_chunk=w_chunk)

    out_view = pl.pallas_call(
        kernel,
        out_shape=jax.ShapeDtypeStruct(out_view_shape, x.dtype),
        grid=(B, c_out // c_blk),
        in_specs=[
            pl.BlockSpec((1, c_blk, ry * rx, H, W),
                         lambda b, cb: (b, cb, 0, 0, 0)),
        ],
        out_specs=pl.BlockSpec((1, c_blk, H, ry * W * rx),
                               lambda b, cb: (b, cb, 0, 0)),
        compiler_params=pltpu.CompilerParams(
            dimension_semantics=("parallel", "parallel")),
    )(x_view)

    # Free contiguous reshape back to the NCHW output of the PyTorch module.
    return out_view.reshape(B, c_out, H * ry, W * rx)


def _reference(x, ry=2, rx=2):
    B, C, H, W = x.shape
    y = x.reshape(B, C // (ry * rx), ry, rx, H, W)
    y = jnp.transpose(y, (0, 1, 4, 2, 5, 3))
    return y.reshape(B, C // (ry * rx), H * ry, W * rx)


if __name__ == "__main__":
    key = jax.random.PRNGKey(0)
    B, C, H, W = 2, 8, 16, 16  # C divisible by ry*rx = 4
    x = jax.random.normal(key, (B, C, H, W), dtype=jnp.float32)

    out = pixel_unshuffle(x, ry=2, rx=2)
    out = jax.block_until_ready(out)

    ref = _reference(x, ry=2, rx=2)
    assert out.shape == ref.shape, (out.shape, ref.shape)
    assert out.dtype == ref.dtype, (out.dtype, ref.dtype)
    assert jnp.array_equal(out, ref), "mismatch vs reference"

    print("KERNEL_OK")
</pallas_src>

<mosaic_0001>
module attributes {stable_mosaic.version = 11 : i64} {
  func.func @_pixel_shuffle_kernel(%arg0: i32, %arg1: i32, %arg2: memref<1x2x4x16x16xf32, #tpu.memory_space<vmem>>, %arg3: memref<1x2x16x64xf32, #tpu.memory_space<vmem>>) attributes {dimension_semantics = [#tpu.dimension_semantics<parallel>, #tpu.dimension_semantics<parallel>], iteration_bounds = array<i64: 2, 1>, scalar_prefetch = 0 : i64, scratch_operands = 0 : i64, tpu.core_type = #tpu.core_type<tc>, window_params = [{transform_indices = @transform_0, window_bounds = array<i64: 1, 2, 4, 16, 16>}, {transform_indices = @transform_1, window_bounds = array<i64: 1, 2, 16, 64>}]} {
    %0 = tpu.iota {dimensions = array<i32: 0>} : vector<16x32xi32>
    %1 = tpu.iota {dimensions = array<i32: 1>} : vector<16x32xi32>
    %c2_i32 = arith.constant 2 : i32
    %2 = vector.broadcast %c2_i32 : i32 to vector<16x32xi32>
    %3 = arith.muli %0, %2 : vector<16x32xi32>
    %c0_i32 = arith.constant 0 : i32
    %4 = vector.broadcast %c0_i32 : i32 to vector<16x32xi32>
    %5 = arith.addi %3, %4 : vector<16x32xi32>
    %6 = arith.cmpi eq, %1, %5 : vector<16x32xi32>
    %7 = arith.extui %6 : vector<16x32xi1> to vector<16x32xi32>
    %8 = arith.sitofp %7 : vector<16x32xi32> to vector<16x32xf32>
    %c2_i32_0 = arith.constant 2 : i32
    %9 = vector.broadcast %c2_i32_0 : i32 to vector<16x32xi32>
    %10 = arith.muli %0, %9 : vector<16x32xi32>
    %c1_i32 = arith.constant 1 : i32
    %11 = vector.broadcast %c1_i32 : i32 to vector<16x32xi32>
    %12 = arith.addi %10, %11 : vector<16x32xi32>
    %13 = arith.cmpi eq, %1, %12 : vector<16x32xi32>
    %14 = arith.extui %13 : vector<16x32xi1> to vector<16x32xi32>
    %15 = arith.sitofp %14 : vector<16x32xi32> to vector<16x32xf32>
    %c0 = arith.constant 0 : index
    %c0_1 = arith.constant 0 : index
    %c0_2 = arith.constant 0 : index
    %c0_3 = arith.constant 0 : index
    %c0_4 = arith.constant 0 : index
    %16 = vector.load %arg2[%c0, %c0_1, %c0_2, %c0_3, %c0_4] : memref<1x2x4x16x16xf32, #tpu.memory_space<vmem>>, vector<1x2x1x16x16xf32>
    %17 = vector.shape_cast %16 : vector<1x2x1x16x16xf32> to vector<2x16x16xf32>
    %18 = vector.shape_cast %17 : vector<2x16x16xf32> to vector<32x16xf32>
    %cst = arith.constant dense<0.000000e+00> : vector<32x32xf32>
    %19 = tpu.matmul %18, %8, %cst {dimension_numbers = #tpu.dot_dimension_numbers<[1], [0], [0], [1], [0, 0, 1, 1], [], []>} : vector<32x16xf32>, vector<16x32xf32>, vector<32x32xf32> -> vector<32x32xf32>
    %c0_5 = arith.constant 0 : index
    %c0_6 = arith.constant 0 : index
    %c1 = arith.constant 1 : index
    %c0_7 = arith.constant 0 : index
    %c0_8 = arith.constant 0 : index
    %20 = vector.load %arg2[%c0_5, %c0_6, %c1, %c0_7, %c0_8] : memref<1x2x4x16x16xf32, #tpu.memory_space<vmem>>, vector<1x2x1x16x16xf32>
    %21 = vector.shape_cast %20 : vector<1x2x1x16x16xf32> to vector<2x16x16xf32>
    %22 = vector.shape_cast %21 : vector<2x16x16xf32> to vector<32x16xf32>
    %cst_9 = arith.constant dense<0.000000e+00> : vector<32x32xf32>
    %23 = tpu.matmul %22, %15, %cst_9 {dimension_numbers = #tpu.dot_dimension_numbers<[1], [0], [0], [1], [0, 0, 1, 1], [], []>} : vector<32x16xf32>, vector<16x32xf32>, vector<32x32xf32> -> vector<32x32xf32>
    %24 = arith.addf %19, %23 : vector<32x32xf32>
    %25 = vector.shape_cast %24 : vector<32x32xf32> to vector<2x16x32xf32>
    %c0_10 = arith.constant 0 : index
    %c0_11 = arith.constant 0 : index
    %c0_12 = arith.constant 0 : index
    %c0_13 = arith.constant 0 : index
    %26 = vector.load %arg3[%c0_10, %c0_11, %c0_12, %c0_13] : memref<1x2x16x64xf32, #tpu.memory_space<vmem>>, vector<1x2x16x32xf32>
    %27 = vector.shape_cast %26 : vector<1x2x16x32xf32> to vector<2x16x32xf32>
    %28 = vector.shape_cast %25 : vector<2x16x32xf32> to vector<1x2x16x32xf32>
    tpu.vector_store %arg3[%c0_10, %c0_11, %c0_12, %c0_13], %28 {strides = array<i32>} : memref<1x2x16x64xf32, #tpu.memory_space<vmem>>, vector<1x2x16x32xf32>,
    %c0_14 = arith.constant 0 : index
    %c0_15 = arith.constant 0 : index
    %c2 = arith.constant 2 : index
    %c0_16 = arith.constant 0 : index
    %c0_17 = arith.constant 0 : index
    %29 = vector.load %arg2[%c0_14, %c0_15, %c2, %c0_16, %c0_17] : memref<1x2x4x16x16xf32, #tpu.memory_space<vmem>>, vector<1x2x1x16x16xf32>
    %30 = vector.shape_cast %29 : vector<1x2x1x16x16xf32> to vector<2x16x16xf32>
    %31 = vector.shape_cast %30 : vector<2x16x16xf32> to vector<32x16xf32>
    %cst_18 = arith.constant dense<0.000000e+00> : vector<32x32xf32>
    %32 = tpu.matmul %31, %8, %cst_18 {dimension_numbers = #tpu.dot_dimension_numbers<[1], [0], [0], [1], [0, 0, 1, 1], [], []>} : vector<32x16xf32>, vector<16x32xf32>, vector<32x32xf32> -> vector<32x32xf32>
    %c0_19 = arith.constant 0 : index
    %c0_20 = arith.constant 0 : index
    %c3 = arith.constant 3 : index
    %c0_21 = arith.constant 0 : index
    %c0_22 = arith.constant 0 : index
    %33 = vector.load %arg2[%c0_19, %c0_20, %c3, %c0_21, %c0_22] : memref<1x2x4x16x16xf32, #tpu.memory_space<vmem>>, vector<1x2x1x16x16xf32>
    %34 = vector.shape_cast %33 : vector<1x2x1x16x16xf32> to vector<2x16x16xf32>
    %35 = vector.shape_cast %34 : vector<2x16x16xf32> to vector<32x16xf32>
    %cst_23 = arith.constant dense<0.000000e+00> : vector<32x32xf32>
    %36 = tpu.matmul %35, %15, %cst_23 {dimension_numbers = #tpu.dot_dimension_numbers<[1], [0], [0], [1], [0, 0, 1, 1], [], []>} : vector<32x16xf32>, vector<16x32xf32>, vector<32x32xf32> -> vector<32x32xf32>
    %37 = arith.addf %32, %36 : vector<32x32xf32>
    %38 = vector.shape_cast %37 : vector<32x32xf32> to vector<2x16x32xf32>
    %c0_24 = arith.constant 0 : index
    %c0_25 = arith.constant 0 : index
    %c0_26 = arith.constant 0 : index
    %c32 = arith.constant 32 : index
    %39 = vector.load %arg3[%c0_24, %c0_25, %c0_26, %c32] : memref<1x2x16x64xf32, #tpu.memory_space<vmem>>, vector<1x2x16x32xf32>
    %40 = vector.shape_cast %39 : vector<1x2x16x32xf32> to vector<2x16x32xf32>
    %41 = vector.shape_cast %38 : vector<2x16x32xf32> to vector<1x2x16x32xf32>
    tpu.vector_store %arg3[%c0_24, %c0_25, %c0_26, %c32], %41 {strides = array<i32>} : memref<1x2x16x64xf32, #tpu.memory_space<vmem>>, vector<1x2x16x32xf32>,
    return
  }
  func.func @transform_0(%arg0: i32, %arg1: i32) -> (i32, i32, i32, i32, i32) {
    %c0_i32 = arith.constant 0 : i32
    %c0_i32_0 = arith.constant 0 : i32
    %c0_i32_1 = arith.constant 0 : i32
    %c0_i32_2 = arith.constant 0 : i32
    return %arg0, %arg1, %c0_i32, %c0_i32_0, %c0_i32_1 : i32, i32, i32, i32, i32
  }
  func.func @transform_1(%arg0: i32, %arg1: i32) -> (i32, i32, i32, i32) {
    %c0_i32 = arith.constant 0 : i32
    %c0_i32_0 = arith.constant 0 : i32
    %c0_i32_1 = arith.constant 0 : i32
    return %arg0, %arg1, %c0_i32, %c0_i32_0 : i32, i32, i32, i32
  }
}

</mosaic_0001>

<llo_original>
// kernel: tpu_custom_call.1
$region0: #{tpu_custom_call.1}
  #allocation0 [shape = 'u32[]', space=smem, size = 0x4, offset = 0x4, fixed_abs, tag = 'smem constant byte address 0x4 - core index']
  #allocation1 [shape = 'u32[144,128]{1,0:T(1,128)}', space=vmem, size = 0x12000, scoped, tag = 'internal scratch']
  %s0 = inlined_call_operand.hbm [shape: f32[2,2,4,16,16], index: 0, kind: input, shape index: {}]
  %s1 = inlined_call_operand.hbm [shape: f32[2,2,16,64], index: 1, kind: output, shape index: {}]
  %s2 = sld [smem:[#allocation0]]
  $region41: #{tpu_custom_call.1} parent=0
    _
  %s4 = ssub.s32 1, %s2
  %s5 = scalar_select 0, %s4, %s2
  $region1: #{tpu_custom_call.1} parent=0
    #allocation2 [shape = 'u8[131072]{0}', space=vmem, size = 0x20000, scoped, tag = 'input window, operand 0']
    #allocation3 [shape = 's32[2]{0}', space=sflag, size = 0x8, scoped, tag = 'scoped memory for tpu_custom_call.1']
    #allocation4 [shape = 's32[2]{0}', space=sflag, size = 0x8, scoped, tag = 'scoped memory for tpu_custom_call.1']
    #allocation5 [shape = 'u8[32768]{0}', space=vmem, size = 0x8000, scoped, tag = 'output window, operand 0']
    %6 = vsyncpa [#allocation3], 0
    %s7 = scalar_lea.sflag [#allocation3], 1
    %8 = vsyncpa %s7, 0
    %9 = vsyncpa [#allocation4], 0
    %s10 = scalar_lea.sflag [#allocation4], 1
    %11 = vsyncpa %s10, 0
    loop: start=0, step=1, limit=4
    $region2: #{tpu_custom_call.1} parent=1 // loop_pre_header
      _
    $region3: #{tpu_custom_call.1} parent=1 // loop_header
      %s13 = sphi 0, %s17
      %p14 = scmp.ge.s32.totalorder %s13, 4
      %s20 = sphi 0, %s32
      %s21 = sphi 0, %s28
      %s22 = sphi 0, %s20
      %s23 = sphi 0, %s21
      %s24 = sphi 0, %s22
      %s25 = sphi 0, %s23
      %s37 = sphi 0, %s39
      %s40 = sphi 0, %s37
      %s41 = sphi 0, %s40
      %s57 = sphi 0, %s41
      %s65 = sphi 0, %s67
      %s68 = sphi 0, %s65
      %s69 = sphi 0, %s68
      %s85 = sphi 0, %s69
    $region4: #{tpu_custom_call.1} parent=1 // loop_header_branch
      %16 = sbr.rel (%p14) target = $region8
    $region5: #{tpu_custom_call.1} parent=1 // loop_body
      %s18 = ssub.s32 %s13, 1
      %s19 = ssub.s32 %s13, 2
      %s26 = sadd.s32 1, %s21
      %p27 = scmp.ge.s32.totalorder %s26, 1
      %s28 = scalar_select %p27, 0, %s26
      %s29 = sadd.s32 1, %s20
      %s30 = scalar_select %p27, %s29, %s20
      %p31 = scmp.ge.s32.totalorder %s30, 2
      %s32 = scalar_select %p31, 0, %s30
      %s33 = ssub.s32 %s20, %s32
      %s34 = ssub.s32 %s21, %s28
      %s35 = sor.u32 %s33, %s34
      %p36 = scmp.eq.s32.totalorder %s35, 0
      %s38 = sadd.s32 %s37, 1
      %s39 = scalar_select %p36, %s37, %s38
      %p42 = pneg %p36
      %p43 = scmp.eq.s32.totalorder %s13, 1
      %p44 = por %p42, %p43
      %p45 = scmp.ne.s32.totalorder %s37, %s40
      %p46 = scmp.eq.s32.totalorder %s13, 0
      %p47 = por %p45, %p46
      %p48 = scmp.ne.s32.totalorder %s37, %s40
      %p49 = scmp.eq.s32.totalorder %s18, 1
      %p50 = por %p48, %p49
      %p51 = scmp.ne.s32.totalorder %s40, %s41
      %p52 = scmp.eq.s32.totalorder %s18, 0
      %p53 = por %p51, %p52
      %p54 = scmp.ne.s32.totalorder %s40, %s41
      %p55 = scmp.eq.s32.totalorder %s19, 1
      %p56 = por %p54, %p55
      %p58 = scmp.ne.s32.totalorder %s41, %s57
      %p59 = scmp.eq.s32.totalorder %s19, 0
      %p60 = por %p58, %p59
      %s61 = ssub.s32 %s20, %s32
      %s62 = ssub.s32 %s21, %s28
      %s63 = sor.u32 %s61, %s62
      %p64 = scmp.eq.s32.totalorder %s63, 0
      %s66 = sadd.s32 %s65, 1
      %s67 = scalar_select %p64, %s65, %s66
      %p70 = pneg %p64
      %p71 = scmp.eq.s32.totalorder %s13, 1
      %p72 = por %p70, %p71
      %p73 = scmp.ne.s32.totalorder %s65, %s68
      %p74 = scmp.eq.s32.totalorder %s13, 0
      %p75 = por %p73, %p74
      %p76 = scmp.ne.s32.totalorder %s65, %s68
      %p77 = scmp.eq.s32.totalorder %s18, 1
      %p78 = por %p76, %p77
      %p79 = scmp.ne.s32.totalorder %s68, %s69
      %p80 = scmp.eq.s32.totalorder %s18, 0
      %p81 = por %p79, %p80
      %p82 = scmp.ne.s32.totalorder %s68, %s69
      %p83 = scmp.eq.s32.totalorder %s19, 1
      %p84 = por %p82, %p83
      %p86 = scmp.ne.s32.totalorder %s69, %s85
      %p87 = scmp.eq.s32.totalorder %s19, 0
      %p88 = por %p86, %p87
      %p89 = scmp.le.s32.totalorder 1, %s13
      %p90 = scmp.lt.s32.totalorder %s13, 3
      %p91 = pnand %p89, %p90
      %p92 = pneg %p91
      // Predicated region
      $region9: #{tpu_custom_call.1} parent=5 // pred_check
        _
      $region10: #{tpu_custom_call.1} parent=5 // pred_check_branch
        %94 = sbr.rel (%p91) target = $region12
      $region11: #{tpu_custom_call.1} parent=5 // pred_region
        %s95 = ssub.s32 %s13, 1
      $region12: #{tpu_custom_call.1} parent=5 // pred_fallthru
        _
      %p96 = scmp.lt.s32.totalorder %s13, 2
      // Predicated region
      $region13: #{tpu_custom_call.1} parent=5 // pred_check
        %p97 = pneg %p96
      $region14: #{tpu_custom_call.1} parent=5 // pred_check_branch
        %99 = sbr.rel (%p97) target = $region16
      $region15: #{tpu_custom_call.1} parent=5 // pred_region
        // Predicated region
        $region17: #{tpu_custom_call.1} parent=15 // pred_check
          %p100 = pneg %p47
        $region18: #{tpu_custom_call.1} parent=15 // pred_check_branch
          %102 = sbr.rel (%p100) target = $region20
        $region19: #{tpu_custom_call.1} parent=15 // pred_region
          %s103 = sand.u32 %s37, 1
          %s104 = scalar_lea.sflag [#allocation3], %s103
          %s105 = sand.u32 %s37, 1
          %s106 = smul.addr %s105, 128
          %s107 = scalar_lea.vmem [#allocation2], %s106
          %s108 = smul.u32 2, %s21
          %s110 = ssub.s32 2048, 2048
          %111 = vsyncadd %s104, %s110
          %s112 = smul.addr %s108, 8
          %s113 = smul.addr %s20, 16
          %s114 = sadd.s32 %s112, %s113
          %s115 = smul.addr %s114, 128
          %s116 = scalar_lea.hbm %s0, %s115
          %s117 = sshll.u32 %s107, 4
          %s118 = int_to_ptr.vmem [resolvable:$true] %s117
          %123 = dma.hbm_to_vmem [thread:$0]  %s116, 2048, %s118, %s104, 128, 128, 8
        $region20: #{tpu_custom_call.1} parent=15 // pred_fallthru
          _
      $region16: #{tpu_custom_call.1} parent=5 // pred_fallthru
        _
      %p124 = scmp.le.s32.totalorder 1, %s13
      %p125 = scmp.lt.s32.totalorder %s13, 3
      %p126 = pnand %p124, %p125
      %p127 = pneg %p126
      // Predicated region
      $region21: #{tpu_custom_call.1} parent=5 // pred_check
        _
      $region22: #{tpu_custom_call.1} parent=5 // pred_check_branch
        %129 = sbr.rel (%p126) target = $region24
      $region23: #{tpu_custom_call.1} parent=5 // pred_region
        %s130 = ssub.s32 %s13, 1
        %s131 = sand.u32 %s40, 1
        %s132 = scalar_lea.sflag [#allocation3], %s131
        %s133 = sand.u32 %s40, 1
        %s134 = smul.addr %s133, 128
        %s135 = scalar_lea.vmem [#allocation2], %s134
        // Predicated region
        $region25: #{tpu_custom_call.1} parent=23 // pred_check
          %p136 = pneg %p53
        $region26: #{tpu_custom_call.1} parent=23 // pred_check_branch
          %138 = sbr.rel (%p136) target = $region28
        $region27: #{tpu_custom_call.1} parent=23 // pred_region
          %139 = dma.done %s132, 2048
        $region28: #{tpu_custom_call.1} parent=23 // pred_fallthru
          _
        %s140 = sand.u32 %s40, 1
        %s141 = scalar_lea.sflag [#allocation3], %s140
        %s142 = sand.u32 %s40, 1
        %s143 = smul.addr %s142, 128
        %s144 = scalar_lea.vmem [#allocation2], %s143
        %p145 = pneg %p53
        %p146 = pneg %p50
        %p147 = pneg %p81
        %p148 = pneg %p78
        %s149 = sand.u32 %s68, 1
        %s150 = scalar_lea.sflag [#allocation4], %s149
        %s151 = sand.u32 %s68, 1
        %s152 = smul.addr %s151, 32
        %s153 = scalar_lea.vmem [#allocation5], %s152
        %s154 = smul.u32 2, %s23
        %s155 = smul.u32 2, %s23
        %v156 = vlaneseq
        %v157 = vshrl.u32 %v156, 7
        %v158 = vadd.s32 %v157, 8
        %v159 = vlaneseq
        %v160 = vand.u32 %v159, 127
        %v161 = vmul.u32 %v157, 2
        %v162 = vmul.u32 %v158, 2
        %vm163 = vcmp.eq.s32.totalorder %v160, %v161
        %vm164 = vcmp.eq.s32.totalorder %v160, %v162
        %v165 = vsel %vm163, 1, 0
        %v166 = vsel %vm164, 1, 0
        %v167 = vcvt.s32.f32 %v165
        %v168 = vcvt.s32.f32 %v166
        %v169 = vadd.s32 %v161, 1
        %v170 = vadd.s32 %v162, 1
        %vm171 = vcmp.eq.s32.totalorder %v160, %v169
        %vm172 = vcmp.eq.s32.totalorder %v160, %v170
        %v173 = vsel %vm171, 1, 0
        %v174 = vsel %vm172, 1, 0
        %v175 = vcvt.s32.f32 %v173
        %v176 = vcvt.s32.f32 %v174
        %v177 = vld [vmem:[%s135] sm:$0xff]
        %v178 = vld [vmem:[%s135 + $0x8] sm:$0xff]
        %v179 = vld [vmem:[%s135 + $0x40] sm:$0xff]
        %v180 = vld [vmem:[%s135 + $0x48] sm:$0xff]
        %s181 = scalar_lea.vmem %s135, 16 [#allocation2]
        %v182 = vld [vmem:[%s181] sm:$0xff]
        %v183 = vld [vmem:[%s181 + $0x8] sm:$0xff]
        %v184 = vld [vmem:[%s181 + $0x40] sm:$0xff]
        %v185 = vld [vmem:[%s181 + $0x48] sm:$0xff]
        %vm186 = vcmask 130048
        %v188 = vsel %vm186, %v182, 0
        %v191 = vsel %vm186, %v183, 0
        %v194 = vsel %vm186, %v184, 0
        %v197 = vsel %vm186, %v185, 0
        %199 = vmatprep.subr.mxu0 0.0
        %200 = vmatpush1.msra.mxu0 0.0
        %201 = vmatprep.subr.mxu0 0.0
        %202 = vmatpush1.msra.mxu0 0.0
        %203 = vmatprep.subr.mxu0 0.0
        %204 = vmatpush1.msra.mxu0 0.0
        %205 = vmatprep.subr.mxu0 0.0
        %206 = vmatpush1.msra.mxu0 0.0
        %207 = vmatprep.subr.mxu0 0.0
        %208 = vmatpush1.msra.mxu0 0.0
        %209 = vmatprep.subr.mxu0 0.0
        %210 = vmatpush1.msra.mxu0 0.0
        %211 = vmatprep.subr.mxu0 0.0
        %212 = vmatpush1.msra.mxu0 0.0
        %213 = vmatprep.subr.mxu0 0.0
        %214 = vmatpush1.msra.mxu0 0.0
        %215 = vmatprep.subr.mxu0 0.0
        %216 = vmatpush1.msra.mxu0 0.0
        %217 = vmatprep.subr.mxu0 0.0
        %218 = vmatpush1.msra.mxu0 0.0
        %219 = vmatprep.subr.mxu0 0.0
        %220 = vmatpush1.msra.mxu0 0.0
        %221 = vmatprep.subr.mxu0 0.0
        %222 = vmatpush1.msra.mxu0 0.0
        %223 = vmatprep.subr.mxu0 0.0
        %224 = vmatpush1.msra.mxu0 0.0
        %225 = vmatprep.subr.mxu0 0.0
        %226 = vmatpush1.msra.mxu0 0.0
        %227 = vmatprep.subr.mxu0 0.0
        %228 = vmatpush1.msra.mxu0 %v176
        %229 = vmatprep.subr.mxu0 0.0
        %230 = vmatpush1.msra.mxu0 %v175
        %231 = vmatprep.subr.mxu0 0.0
        %232 = vmatpush2.msra.mxu0 0.0
        %233 = vmatprep.subr.mxu0 0.0
        %234 = vmatpush2.msra.mxu0 0.0
        %235 = vmatprep.subr.mxu0 0.0
        %236 = vmatpush2.msra.mxu0 0.0
        %237 = vmatprep.subr.mxu0 0.0
        %238 = vmatpush2.msra.mxu0 0.0
        %239 = vmatprep.subr.mxu0 0.0
        %240 = vmatpush2.msra.mxu0 0.0
        %241 = vmatprep.subr.mxu0 0.0
        %242 = vmatpush2.msra.mxu0 0.0
        %243 = vmatprep.subr.mxu0 0.0
        %244 = vmatpush2.msra.mxu0 0.0
        %245 = vmatprep.subr.mxu0 0.0
        %246 = vmatpush2.msra.mxu0 0.0
        %247 = vmatprep.subr.mxu0 0.0
        %248 = vmatpush2.msra.mxu0 0.0
        %249 = vmatprep.subr.mxu0 0.0
        %250 = vmatpush2.msra.mxu0 0.0
        %251 = vmatprep.subr.mxu0 0.0
        %252 = vmatpush2.msra.mxu0 0.0
        %253 = vmatprep.subr.mxu0 0.0
        %254 = vmatpush2.msra.mxu0 0.0
        %255 = vmatprep.subr.mxu0 0.0
        %256 = vmatpush2.msra.mxu0 0.0
        %257 = vmatprep.subr.mxu0 0.0
        %258 = vmatpush2.msra.mxu0 0.0
        %259 = vmatprep.subr.mxu0 0.0
        %260 = vmatpush2.msra.mxu0 0.0
        %261 = vmatprep.subr.mxu0 0.0
        %262 = vmatpush2.msra.mxu0 0.0
        %263 = vmatprep.mubr.f32.mxu0 0.0
        %264 = vmatmul.mubr.f32.gmra.mxu0 %v188
        %v265 = vpop.f32.mrf.mxu0
        %v266 = vadd.f32 0.0, %v265
        %v267 = vpop.f32.mrf.mxu0
        %268 = vmatprep.mubr.f32.mxu0 0.0
        %269 = vmatmul.mubr.f32.gmra.mxu0 %v191
        %v270 = vpop.f32.mrf.mxu0
        %v271 = vadd.f32 0.0, %v270
        %v272 = vpop.f32.mrf.mxu0
        %273 = vmatprep.mubr.f32.mxu0 0.0
        %274 = vmatmul.mubr.f32.gmra.mxu0 %v194
        %v275 = vpop.f32.mrf.mxu0
        %v276 = vadd.f32 0.0, %v275
        %v277 = vpop.f32.mrf.mxu0
        %278 = vmatprep.mubr.f32.mxu0 0.0
        %279 = vmatmul.mubr.f32.gmra.mxu0 %v197
        %v280 = vpop.f32.mrf.mxu0
        %v281 = vadd.f32 0.0, %v280
        %v282 = vpop.f32.mrf.mxu0
        %283 = vdwg.mxu0
        %v285 = vsel %vm186, %v177, 0
        %v288 = vsel %vm186, %v178, 0
        %v291 = vsel %vm186, %v179, 0
        %v294 = vsel %vm186, %v180, 0
        %296 = vmatprep.subr.mxu0 0.0
        %297 = vmatpush1.msra.mxu0 0.0
        %298 = vmatprep.subr.mxu0 0.0
        %299 = vmatpush1.msra.mxu0 0.0
        %300 = vmatprep.subr.mxu0 0.0
        %301 = vmatpush1.msra.mxu0 0.0
        %302 = vmatprep.subr.mxu0 0.0
        %303 = vmatpush1.msra.mxu0 0.0
        %304 = vmatprep.subr.mxu0 0.0
        %305 = vmatpush1.msra.mxu0 0.0
        %306 = vmatprep.subr.mxu0 0.0
        %307 = vmatpush1.msra.mxu0 0.0
        %308 = vmatprep.subr.mxu0 0.0
        %309 = vmatpush1.msra.mxu0 0.0
        %310 = vmatprep.subr.mxu0 0.0
        %311 = vmatpush1.msra.mxu0 0.0
        %312 = vmatprep.subr.mxu0 0.0
        %313 = vmatpush1.msra.mxu0 0.0
        %314 = vmatprep.subr.mxu0 0.0
        %315 = vmatpush1.msra.mxu0 0.0
        %316 = vmatprep.subr.mxu0 0.0
        %317 = vmatpush1.msra.mxu0 0.0
        %318 = vmatprep.subr.mxu0 0.0
        %319 = vmatpush1.msra.mxu0 0.0
        %320 = vmatprep.subr.mxu0 0.0
        %321 = vmatpush1.msra.mxu0 0.0
        %322 = vmatprep.subr.mxu0 0.0
        %323 = vmatpush1.msra.mxu0 0.0
        %324 = vmatprep.subr.mxu0 0.0
        %325 = vmatpush1.msra.mxu0 %v168
        %326 = vmatprep.subr.mxu0 0.0
        %327 = vmatpush1.msra.mxu0 %v167
        %328 = vmatprep.subr.mxu0 0.0
        %329 = vmatpush2.msra.mxu0 0.0
        %330 = vmatprep.subr.mxu0 0.0
        %331 = vmatpush2.msra.mxu0 0.0
        %332 = vmatprep.subr.mxu0 0.0
        %333 = vmatpush2.msra.mxu0 0.0
        %334 = vmatprep.subr.mxu0 0.0
        %335 = vmatpush2.msra.mxu0 0.0
        %336 = vmatprep.subr.mxu0 0.0
        %337 = vmatpush2.msra.mxu0 0.0
        %338 = vmatprep.subr.mxu0 0.0
        %339 = vmatpush2.msra.mxu0 0.0
        %340 = vmatprep.subr.mxu0 0.0
        %341 = vmatpush2.msra.mxu0 0.0
        %342 = vmatprep.subr.mxu0 0.0
        %343 = vmatpush2.msra.mxu0 0.0
        %344 = vmatprep.subr.mxu0 0.0
        %345 = vmatpush2.msra.mxu0 0.0
        %346 = vmatprep.subr.mxu0 0.0
        %347 = vmatpush2.msra.mxu0 0.0
        %348 = vmatprep.subr.mxu0 0.0
        %349 = vmatpush2.msra.mxu0 0.0
        %350 = vmatprep.subr.mxu0 0.0
        %351 = vmatpush2.msra.mxu0 0.0
        %352 = vmatprep.subr.mxu0 0.0
        %353 = vmatpush2.msra.mxu0 0.0
        %354 = vmatprep.subr.mxu0 0.0
        %355 = vmatpush2.msra.mxu0 0.0
        %356 = vmatprep.subr.mxu0 0.0
        %357 = vmatpush2.msra.mxu0 0.0
        %358 = vmatprep.subr.mxu0 0.0
        %359 = vmatpush2.msra.mxu0 0.0
        %360 = vmatprep.mubr.f32.mxu0 0.0
        %361 = vmatmul.mubr.f32.gmra.mxu0 %v285
        %v362 = vpop.f32.mrf.mxu0
        %v363 = vadd.f32 %v266, %v362
        %v364 = vpop.f32.mrf.mxu0
        %365 = vmatprep.mubr.f32.mxu0 0.0
        %366 = vmatmul.mubr.f32.gmra.mxu0 %v288
        %v367 = vpop.f32.mrf.mxu0
        %v368 = vadd.f32 %v271, %v367
        %v369 = vpop.f32.mrf.mxu0
        %370 = vmatprep.mubr.f32.mxu0 0.0
        %371 = vmatmul.mubr.f32.gmra.mxu0 %v291
        %v372 = vpop.f32.mrf.mxu0
        %v373 = vadd.f32 %v276, %v372
        %v374 = vpop.f32.mrf.mxu0
        %375 = vmatprep.mubr.f32.mxu0 0.0
        %376 = vmatmul.mubr.f32.gmra.mxu0 %v294
        %v377 = vpop.f32.mrf.mxu0
        %v378 = vadd.f32 %v281, %v377
        %v379 = vpop.f32.mrf.mxu0
        %380 = vdwg.mxu0
        %vm381 = vcmask 261120
        %382 = vst.msk [vmem:[%s153] sm:$0xff] %vm381, %v363
        %383 = vst.msk [vmem:[%s153 + $0x8] sm:$0xff] %vm381, %v368
        %384 = vst.msk [vmem:[%s153 + $0x10] sm:$0xff] %vm381, %v373
        %385 = vst.msk [vmem:[%s153 + $0x18] sm:$0xff] %vm381, %v378
        %s386 = scalar_lea.vmem %s135, 32 [#allocation2]
        %v387 = vld [vmem:[%s386] sm:$0xff]
        %v388 = vld [vmem:[%s386 + $0x8] sm:$0xff]
        %v389 = vld [vmem:[%s386 + $0x40] sm:$0xff]
        %v390 = vld [vmem:[%s386 + $0x48] sm:$0xff]
        %s391 = scalar_lea.vmem %s135, 48 [#allocation2]
        %v392 = vld [vmem:[%s391] sm:$0xff]
        %v393 = vld [vmem:[%s391 + $0x8] sm:$0xff]
        %v394 = vld [vmem:[%s391 + $0x40] sm:$0xff]
        %v395 = vld [vmem:[%s391 + $0x48] sm:$0xff]
        %v397 = vsel %vm186, %v392, 0
        %v400 = vsel %vm186, %v393, 0
        %v403 = vsel %vm186, %v394, 0
        %v406 = vsel %vm186, %v395, 0
        %408 = vmatprep.subr.mxu0 0.0
        %409 = vmatpush1.msra.mxu0 0.0
        %410 = vmatprep.subr.mxu0 0.0
        %411 = vmatpush1.msra.mxu0 0.0
        %412 = vmatprep.subr.mxu0 0.0
        %413 = vmatpush1.msra.mxu0 0.0
        %414 = vmatprep.subr.mxu0 0.0
        %415 = vmatpush1.msra.mxu0 0.0
        %416 = vmatprep.subr.mxu0 0.0
        %417 = vmatpush1.msra.mxu0 0.0
        %418 = vmatprep.subr.mxu0 0.0
        %419 = vmatpush1.msra.mxu0 0.0
        %420 = vmatprep.subr.mxu0 0.0
        %421 = vmatpush1.msra.mxu0 0.0
        %422 = vmatprep.subr.mxu0 0.0
        %423 = vmatpush1.msra.mxu0 0.0
        %424 = vmatprep.subr.mxu0 0.0
        %425 = vmatpush1.msra.mxu0 0.0
        %426 = vmatprep.subr.mxu0 0.0
        %427 = vmatpush1.msra.mxu0 0.0
        %428 = vmatprep.subr.mxu0 0.0
        %429 = vmatpush1.msra.mxu0 0.0
        %430 = vmatprep.subr.mxu0 0.0
        %431 = vmatpush1.msra.mxu0 0.0
        %432 = vmatprep.subr.mxu0 0.0
        %433 = vmatpush1.msra.mxu0 0.0
        %434 = vmatprep.subr.mxu0 0.0
        %435 = vmatpush1.msra.mxu0 0.0
        %436 = vmatprep.subr.mxu0 0.0
        %437 = vmatpush1.msra.mxu0 %v176
        %438 = vmatprep.subr.mxu0 0.0
        %439 = vmatpush1.msra.mxu0 %v175
        %440 = vmatprep.subr.mxu0 0.0
        %441 = vmatpush2.msra.mxu0 0.0
        %442 = vmatprep.subr.mxu0 0.0
        %443 = vmatpush2.msra.mxu0 0.0
        %444 = vmatprep.subr.mxu0 0.0
        %445 = vmatpush2.msra.mxu0 0.0
        %446 = vmatprep.subr.mxu0 0.0
        %447 = vmatpush2.msra.mxu0 0.0
        %448 = vmatprep.subr.mxu0 0.0
        %449 = vmatpush2.msra.mxu0 0.0
        %450 = vmatprep.subr.mxu0 0.0
        %451 = vmatpush2.msra.mxu0 0.0
        %452 = vmatprep.subr.mxu0 0.0
        %453 = vmatpush2.msra.mxu0 0.0
        %454 = vmatprep.subr.mxu0 0.0
        %455 = vmatpush2.msra.mxu0 0.0
        %456 = vmatprep.subr.mxu0 0.0
        %457 = vmatpush2.msra.mxu0 0.0
        %458 = vmatprep.subr.mxu0 0.0
        %459 = vmatpush2.msra.mxu0 0.0
        %460 = vmatprep.subr.mxu0 0.0
        %461 = vmatpush2.msra.mxu0 0.0
        %462 = vmatprep.subr.mxu0 0.0
        %463 = vmatpush2.msra.mxu0 0.0
        %464 = vmatprep.subr.mxu0 0.0
        %465 = vmatpush2.msra.mxu0 0.0
        %466 = vmatprep.subr.mxu0 0.0
        %467 = vmatpush2.msra.mxu0 0.0
        %468 = vmatprep.subr.mxu0 0.0
        %469 = vmatpush2.msra.mxu0 0.0
        %470 = vmatprep.subr.mxu0 0.0
        %471 = vmatpush2.msra.mxu0 0.0
        %472 = vmatprep.mubr.f32.mxu0 0.0
        %473 = vmatmul.mubr.f32.gmra.mxu0 %v397
        %v474 = vpop.f32.mrf.mxu0
        %v475 = vadd.f32 0.0, %v474
        %v476 = vpop.f32.mrf.mxu0
        %477 = vmatprep.mubr.f32.mxu0 0.0
        %478 = vmatmul.mubr.f32.gmra.mxu0 %v400
        %v479 = vpop.f32.mrf.mxu0
        %v480 = vadd.f32 0.0, %v479
        %v481 = vpop.f32.mrf.mxu0
        %482 = vmatprep.mubr.f32.mxu0 0.0
        %483 = vmatmul.mubr.f32.gmra.mxu0 %v403
        %v484 = vpop.f32.mrf.mxu0
        %v485 = vadd.f32 0.0, %v484
        %v486 = vpop.f32.mrf.mxu0
        %487 = vmatprep.mubr.f32.mxu0 0.0
        %488 = vmatmul.mubr.f32.gmra.mxu0 %v406
        %v489 = vpop.f32.mrf.mxu0
        %v490 = vadd.f32 0.0, %v489
        %v491 = vpop.f32.mrf.mxu0
        %492 = vdwg.mxu0
        %v494 = vsel %vm186, %v387, 0
        %v497 = vsel %vm186, %v388, 0
        %v500 = vsel %vm186, %v389, 0
        %v503 = vsel %vm186, %v390, 0
        %505 = vmatprep.subr.mxu0 0.0
        %506 = vmatpush1.msra.mxu0 0.0
        %507 = vmatprep.subr.mxu0 0.0
        %508 = vmatpush1.msra.mxu0 0.0
        %509 = vmatprep.subr.mxu0 0.0
        %510 = vmatpush1.msra.mxu0 0.0
        %511 = vmatprep.subr.mxu0 0.0
        %512 = vmatpush1.msra.mxu0 0.0
        %513 = vmatprep.subr.mxu0 0.0
        %514 = vmatpush1.msra.mxu0 0.0
        %515 = vmatprep.subr.mxu0 0.0
        %516 = vmatpush1.msra.mxu0 0.0
        %517 = vmatprep.subr.mxu0 0.0
        %518 = vmatpush1.msra.mxu0 0.0
        %519 = vmatprep.subr.mxu0 0.0
        %520 = vmatpush1.msra.mxu0 0.0
        %521 = vmatprep.subr.mxu0 0.0
        %522 = vmatpush1.msra.mxu0 0.0
        %523 = vmatprep.subr.mxu0 0.0
        %524 = vmatpush1.msra.mxu0 0.0
        %525 = vmatprep.subr.mxu0 0.0
        %526 = vmatpush1.msra.mxu0 0.0
        %527 = vmatprep.subr.mxu0 0.0
        %528 = vmatpush1.msra.mxu0 0.0
        %529 = vmatprep.subr.mxu0 0.0
        %530 = vmatpush1.msra.mxu0 0.0
        %531 = vmatprep.subr.mxu0 0.0
        %532 = vmatpush1.msra.mxu0 0.0
        %533 = vmatprep.subr.mxu0 0.0
        %534 = vmatpush1.msra.mxu0 %v168
        %535 = vmatprep.subr.mxu0 0.0
        %536 = vmatpush1.msra.mxu0 %v167
        %537 = vmatprep.subr.mxu0 0.0
        %538 = vmatpush2.msra.mxu0 0.0
        %539 = vmatprep.subr.mxu0 0.0
        %540 = vmatpush2.msra.mxu0 0.0
        %541 = vmatprep.subr.mxu0 0.0
        %542 = vmatpush2.msra.mxu0 0.0
        %543 = vmatprep.subr.mxu0 0.0
        %544 = vmatpush2.msra.mxu0 0.0
        %545 = vmatprep.subr.mxu0 0.0
        %546 = vmatpush2.msra.mxu0 0.0
        %547 = vmatprep.subr.mxu0 0.0
        %548 = vmatpush2.msra.mxu0 0.0
        %549 = vmatprep.subr.mxu0 0.0
        %550 = vmatpush2.msra.mxu0 0.0
        %551 = vmatprep.subr.mxu0 0.0
        %552 = vmatpush2.msra.mxu0 0.0
        %553 = vmatprep.subr.mxu0 0.0
        %554 = vmatpush2.msra.mxu0 0.0
        %555 = vmatprep.subr.mxu0 0.0
        %556 = vmatpush2.msra.mxu0 0.0
        %557 = vmatprep.subr.mxu0 0.0
        %558 = vmatpush2.msra.mxu0 0.0
        %559 = vmatprep.subr.mxu0 0.0
        %560 = vmatpush2.msra.mxu0 0.0
        %561 = vmatprep.subr.mxu0 0.0
        %562 = vmatpush2.msra.mxu0 0.0
        %563 = vmatprep.subr.mxu0 0.0
        %564 = vmatpush2.msra.mxu0 0.0
        %565 = vmatprep.subr.mxu0 0.0
        %566 = vmatpush2.msra.mxu0 0.0
        %567 = vmatprep.subr.mxu0 0.0
        %568 = vmatpush2.msra.mxu0 0.0
        %569 = vmatprep.mubr.f32.mxu0 0.0
        %570 = vmatmul.mubr.f32.gmra.mxu0 %v494
        %v571 = vpop.f32.mrf.mxu0
        %v572 = vadd.f32 %v475, %v571
        %v573 = vpop.f32.mrf.mxu0
        %574 = vmatprep.mubr.f32.mxu0 0.0
        %575 = vmatmul.mubr.f32.gmra.mxu0 %v497
        %v576 = vpop.f32.mrf.mxu0
        %v577 = vadd.f32 %v480, %v576
        %v578 = vpop.f32.mrf.mxu0
        %579 = vmatprep.mubr.f32.mxu0 0.0
        %580 = vmatmul.mubr.f32.gmra.mxu0 %v500
        %v581 = vpop.f32.mrf.mxu0
        %v582 = vadd.f32 %v485, %v581
        %v583 = vpop.f32.mrf.mxu0
        %584 = vmatprep.mubr.f32.mxu0 0.0
        %585 = vmatmul.mubr.f32.gmra.mxu0 %v503
        %v586 = vpop.f32.mrf.mxu0
        %v587 = vadd.f32 %v490, %v586
        %v588 = vpop.f32.mrf.mxu0
        %589 = vdwg.mxu0
        %594 = vrot.lane.b32.xlu0 %v572, 32
        %v595 = vpop.permute.xlu0 %594
        %596 = vrot.lane.b32.xlu0 %v577, 32
        %v597 = vpop.permute.xlu0 %596
        %598 = vrot.lane.b32.xlu0 %v582, 32
        %v599 = vpop.permute.xlu0 %598
        %600 = vrot.lane.b32.xlu0 %v587, 32
        %v601 = vpop.permute.xlu0 %600
        %vm606 = vcmask 523520
        %607 = vst.msk [vmem:[%s153] sm:$0xff] %vm606, %v595
        %608 = vst.msk [vmem:[%s153 + $0x8] sm:$0xff] %vm606, %v597
        %609 = vst.msk [vmem:[%s153 + $0x10] sm:$0xff] %vm606, %v599
        %610 = vst.msk [vmem:[%s153 + $0x18] sm:$0xff] %vm606, %v601
        %s611 = sand.u32 %s68, 1
        %s612 = scalar_lea.sflag [#allocation4], %s611
        %s613 = sand.u32 %s68, 1
        %s614 = smul.addr %s613, 32
        %s615 = scalar_lea.vmem [#allocation5], %s614
        // Predicated region
        $region29: #{tpu_custom_call.1} parent=23 // pred_check
          %p616 = pneg %p78
        $region30: #{tpu_custom_call.1} parent=23 // pred_check_branch
          %618 = sbr.rel (%p616) target = $region32
        $region31: #{tpu_custom_call.1} parent=23 // pred_region
          %s619 = smul.u32 2, %s23
          %s621 = ssub.s32 512, 512
          %622 = vsyncadd %s612, %s621
          %s623 = smul.addr %s619, 2
          %s624 = smul.addr %s22, 4
          %s625 = sadd.s32 %s623, %s624
          %s626 = smul.addr %s625, 128
          %s627 = scalar_lea.hbm %s1, %s626
          %s628 = sshll.u32 %s615, 4
          %s629 = int_to_ptr.vmem [resolvable:$true] %s628
          %634 = dma.vmem_to_hbm [thread:$0]  %s629, 512, %s627, %s612, 128, 128, 8
        $region32: #{tpu_custom_call.1} parent=23 // pred_fallthru
          _
      $region24: #{tpu_custom_call.1} parent=5 // pred_fallthru
        _
      %p635 = scmp.le.s32.totalorder 2, %s13
      // Predicated region
      $region33: #{tpu_custom_call.1} parent=5 // pred_check
        %p636 = pneg %p635
      $region34: #{tpu_custom_call.1} parent=5 // pred_check_branch
        %638 = sbr.rel (%p636) target = $region36
      $region35: #{tpu_custom_call.1} parent=5 // pred_region
        %s639 = ssub.s32 %s13, 2
        // Predicated region
        $region37: #{tpu_custom_call.1} parent=35 // pred_check
          %p640 = pneg %p84
        $region38: #{tpu_custom_call.1} parent=35 // pred_check_branch
          %642 = sbr.rel (%p640) target = $region40
        $region39: #{tpu_custom_call.1} parent=35 // pred_region
          %s643 = sand.u32 %s69, 1
          %s644 = scalar_lea.sflag [#allocation4], %s643
          %s645 = sand.u32 %s69, 1
          %s646 = smul.addr %s645, 32
          %s647 = scalar_lea.vmem [#allocation5], %s646
          %648 = dma.done %s644, 512
        $region40: #{tpu_custom_call.1} parent=35 // pred_fallthru
          _
      $region36: #{tpu_custom_call.1} parent=5 // pred_fallthru
        _
    $region6: #{tpu_custom_call.1} parent=1 // loop_footer
      %s17 = sadd.s32 1, %s13
    $region7: #{tpu_custom_call.1} parent=1 // loop_footer_branch
      %12 = sbr.rel target = $region3
    $region8: #{tpu_custom_call.1} parent=1 // loop_exit
      _
    %649 = vsyncpa [#allocation3], 1
    %s650 = scalar_lea.sflag [#allocation3], 1
    %651 = vsyncpa %s650, 1
    %652 = vsyncpa [#allocation4], 1
    %s653 = scalar_lea.sflag [#allocation4], 1
    %654 = vsyncpa %s653, 1

</llo_original>
